<compile_context>
chip_gen: v7x
topology: tpu7x:2x2x1
jax: 0.10.0
libtpu: 0.0.40
codegen_flags: <defaults>
</compile_context>

<pallas_src>
import functools

import jax
import jax.numpy as jnp
from jax.experimental import pallas as pl
from jax.experimental.pallas import tpu as pltpu


def _round_up(x, m):
    return ((x + m - 1) // m) * m


def _vmem_capacity_bytes():
    try:
        return int(pltpu.get_tpu_info().vmem_capacity_bytes)
    except Exception:
        return 64 * 1024 * 1024  # conservative fallback: v7x per-TensorCore VMEM


def _default_compute_dtype():
    # bf16 MXU / DMA fast path on v6e / v7x; keep f32 elsewhere (v5e has no bf16 VPU/EUP).
    try:
        kind = jax.devices()[0].device_kind.lower()
    except Exception:
        return jnp.float32
    return jnp.bfloat16 if ("v6" in kind or "v7" in kind) else jnp.float32


def decoder_kernel(z_ref, w1_ref, b1_ref, w2_ref, b2_ref, out_ref, *, approx_sigmoid):
    # Layer 1: MXU matmul with f32 accumulation; bias add + tanh in f32 (EUP).
    z = z_ref[...].astype(w1_ref.dtype)
    h = jnp.dot(z, w1_ref[...], preferred_element_type=jnp.float32)
    h = jnp.tanh(h + b1_ref[...])
    # Layer 2: cast activations to the weight dtype for MXU throughput, f32 accumulation.
    y = jnp.dot(h.astype(w2_ref.dtype), w2_ref[...], preferred_element_type=jnp.float32)
    y = y + b2_ref[...]
    if approx_sigmoid:
        # sigmoid(x) = 1 / (1 + exp(-x)); approx reciprocal runs on the EUP slot.
        y = pl.reciprocal(1.0 + jnp.exp(-y), approx=True)
    else:
        y = jax.nn.sigmoid(y)
    out_ref[...] = y.astype(out_ref.dtype)


def prepare_decoder_params(w1, b1, w2, b2, *, compute_dtype=None):
    """One-time weight/bias preparation: pad feature dims to 128, cast weights.

    Done once so the per-call forward never re-reads/re-writes the weights.
    Zero padding is semantics-preserving: padded W1 columns / b1 entries are 0,
    so padded hidden units are tanh(0) = 0 and contribute nothing to layer 2.
    """
    if compute_dtype is None:
        compute_dtype = _default_compute_dtype()
    d_latent, d_hidden = w1.shape
    d_hidden2, d_data = w2.shape
    assert d_hidden2 == d_hidden
    dh_p = _round_up(d_hidden, 128)
    dd_p = _round_up(d_data, 128)
    w1_p = jnp.pad(w1, ((0, 0), (0, dh_p - d_hidden))).astype(compute_dtype)
    b1_p = jnp.pad(jnp.reshape(b1, (1, -1)),
                   ((0, 0), (0, dh_p - d_hidden))).astype(jnp.float32)
    w2_p = jnp.pad(w2, ((0, dh_p - d_hidden), (0, dd_p - d_data))).astype(compute_dtype)
    b2_p = jnp.pad(jnp.reshape(b2, (1, -1)),
                   ((0, 0), (0, dd_p - d_data))).astype(jnp.float32)
    return dict(w1=w1_p, b1=b1_p, w2=w2_p, b2=b2_p,
                d_latent=d_latent, d_hidden=d_hidden, d_data=d_data,
                dh_p=dh_p, dd_p=dd_p, compute_dtype=compute_dtype)


def decoder_forward(z, params, *, block_batch=1024):
    """z: (B, d_latent) -> sigmoid(tanh(z @ W1 + b1) @ W2 + b2): (B, d_data)."""
    B, d_latent = z.shape
    assert d_latent == params["d_latent"]
    d_data = params["d_data"]
    dh_p, dd_p = params["dh_p"], params["dd_p"]
    compute_dtype = params["compute_dtype"]
    out_dtype = z.dtype

    # --- Output (N) tiling: single step when small, else 128-aligned tiles. ---
    if dd_p <= 2048:
        tn = dd_p
    else:
        tn = 1024
        while dd_p % tn:
            tn -= 128
    nn = dd_p // tn

    # --- Batch tile: multiple of 8; >=2 grid steps for moderate B so the
    # "parallel" batch axis can shard across both v7x TensorCores. ---
    tb = min(block_batch, _round_up(B, 8))
    if B >= 16:
        tb = min(tb, _round_up(pl.cdiv(B, 2), 8))
    tb = max(8, _round_up(tb, 8))

    # --- Per-generation VMEM budget; shrink tb until the estimate fits. ---
    vmem_budget = int(0.85 * _vmem_capacity_bytes())
    w_sz = jnp.dtype(compute_dtype).itemsize
    z_sz = jnp.dtype(z.dtype).itemsize
    o_sz = jnp.dtype(out_dtype).itemsize

    def vmem_estimate(tb_):
        resident = d_latent * dh_p * w_sz + dh_p * 4            # W1, b1 (single copy)
        if nn == 1:
            resident += dh_p * dd_p * w_sz + dd_p * 4           # W2, b2 resident
            streamed_w2 = 0
        else:
            streamed_w2 = 2 * (dh_p * tn * w_sz + tn * 4)        # W2/b2 double-buffered
        streamed = 2 * tb_ * d_latent * z_sz + 2 * tb_ * tn * o_sz + streamed_w2
        interm = tb_ * dh_p * 4 + tb_ * tn * 4                   # f32 h / y live values
        return resident + streamed + interm

    while vmem_estimate(tb) > vmem_budget and tb > 8:
        tb = max(8, _round_up(tb // 2, 8))

    b_p = _round_up(B, tb)
    nb = b_p // tb

    # Only per-call data movement on z: batch padding when needed (never latent).
    z_p = z if b_p == B else jnp.pad(z, ((0, b_p - B), (0, 0)))

    resident_spec = pl.BlockSpec(memory_space=pltpu.MemorySpace.VMEM)
    if nn == 1:
        w2_spec, b2_spec = resident_spec, resident_spec
    else:
        w2_spec = pl.BlockSpec((dh_p, tn), lambda i, j: (0, j))
        b2_spec = pl.BlockSpec((1, tn), lambda i, j: (0, j))

    kernel = functools.partial(
        decoder_kernel, approx_sigmoid=(compute_dtype != jnp.float32))

    out_p = pl.pallas_call(
        kernel,
        out_shape=jax.ShapeDtypeStruct((b_p, dd_p), out_dtype),
        grid_spec=pl.GridSpec(
            grid=(nb, nn),
            in_specs=[
                pl.BlockSpec((tb, d_latent), lambda i, j: (i, 0)),  # z: streamed per tile
                resident_spec,                                       # W1: VMEM-resident
                resident_spec,                                       # b1: VMEM-resident
                w2_spec,                                             # W2
                b2_spec,                                             # b2
            ],
            out_specs=pl.BlockSpec((tb, tn), lambda i, j: (i, j)),   # lane-dense stores
        ),
        compiler_params=pltpu.CompilerParams(
            dimension_semantics=("parallel", "parallel"),  # megacore sharding on v7x
            vmem_limit_bytes=vmem_budget,
        ),
    )(z_p, params["w1"], params["b1"], params["w2"], params["b2"])

    if b_p == B and dd_p == d_data:
        return out_p
    return out_p[:B, :d_data]


def init_decoder_params(key, d_data, d_latent, d_hidden, dtype=jnp.float32):
    """Deterministic init mimicking nn.Linear defaults: U(-1/sqrt(fan_in), 1/sqrt(fan_in))."""
    k1, k2, k3, k4 = jax.random.split(key, 4)
    bound1 = 1.0 / jnp.sqrt(d_latent)
    bound2 = 1.0 / jnp.sqrt(d_hidden)
    w1 = jax.random.uniform(k1, (d_latent, d_hidden), dtype, -bound1, bound1)
    b1 = jax.random.uniform(k2, (d_hidden,), dtype, -bound1, bound1)
    w2 = jax.random.uniform(k3, (d_hidden, d_data), dtype, -bound2, bound2)
    b2 = jax.random.uniform(k4, (d_data,), dtype, -bound2, bound2)
    return w1, b1, w2, b2


if __name__ == "__main__":
    key = jax.random.PRNGKey(0)
    k_z, k_p = jax.random.split(key)

    batch, d_latent, d_hidden, d_data = 8, 16, 32, 64

    z = jax.random.normal(k_z, (batch, d_latent), jnp.float32)
    w1, b1, w2, b2 = init_decoder_params(k_p, d_data, d_latent, d_hidden)

    # Pure-JAX reference.
    ref = jax.nn.sigmoid(jnp.tanh(z @ w1 + b1) @ w2 + b2)

    # f32 compute path: must match the reference tightly.
    params_f32 = prepare_decoder_params(w1, b1, w2, b2, compute_dtype=jnp.float32)
    out_f32 = decoder_forward(z, params_f32)
    jax.block_until_ready(out_f32)
    assert out_f32.shape == (batch, d_data) and out_f32.dtype == z.dtype
    assert jnp.allclose(out_f32, ref, atol=1e-5, rtol=1e-5)

    # Larger batch: exercises >=2 batch grid steps + batch padding + slice.
    z_big = jax.random.normal(k_z, (40, d_latent), jnp.float32)
    ref_big = jax.nn.sigmoid(jnp.tanh(z_big @ w1 + b1) @ w2 + b2)
    out_big = decoder_forward(z_big, params_f32)
    jax.block_until_ready(out_big)
    assert out_big.shape == (40, d_data)
    assert jnp.allclose(out_big, ref_big, atol=1e-5, rtol=1e-5)

    # bf16 fast path (MXU/DMA win on v6e/v7x): f32 accumulation + f32 tanh,
    # approx-reciprocal sigmoid; loose tolerance vs the f32 reference.
    params_bf16 = prepare_decoder_params(w1, b1, w2, b2, compute_dtype=jnp.bfloat16)
    out_bf16 = decoder_forward(z, params_bf16)
    jax.block_until_ready(out_bf16)
    assert out_bf16.shape == (batch, d_data)
    assert jnp.allclose(out_bf16, ref, atol=3e-2, rtol=3e-2)

    print("KERNEL_OK")
</pallas_src>

<mosaic_0001>
module attributes {stable_mosaic.version = 11 : i64} {
  func.func @decoder_kernel(%arg0: i32, %arg1: i32, %arg2: memref<8x16xf32, #tpu.memory_space<vmem>>, %arg3: memref<16x128xf32, #tpu.memory_space<vmem>>, %arg4: memref<1x128xf32, #tpu.memory_space<vmem>>, %arg5: memref<128x128xf32, #tpu.memory_space<vmem>>, %arg6: memref<1x128xf32, #tpu.memory_space<vmem>>, %arg7: memref<8x128xf32, #tpu.memory_space<vmem>>) attributes {dimension_semantics = [#tpu.dimension_semantics<parallel>, #tpu.dimension_semantics<parallel>], iteration_bounds = array<i64: 1, 1>, scalar_prefetch = 0 : i64, scratch_operands = 0 : i64, tpu.core_type = #tpu.core_type<tc>, window_params = [{transform_indices = @transform_0, window_bounds = array<i64: 8, 16>}, {pipeline_mode = #tpu.pipeline_mode<synchronous>, transform_indices = @transform_1, window_bounds = array<i64: 16, 128>}, {pipeline_mode = #tpu.pipeline_mode<synchronous>, transform_indices = @transform_2, window_bounds = array<i64: 1, 128>}, {pipeline_mode = #tpu.pipeline_mode<synchronous>, transform_indices = @transform_3, window_bounds = array<i64: 128, 128>}, {pipeline_mode = #tpu.pipeline_mode<synchronous>, transform_indices = @transform_4, window_bounds = array<i64: 1, 128>}, {transform_indices = @transform_5, window_bounds = array<i64: 8, 128>}]} {
    %c0 = arith.constant 0 : index
    %c0_0 = arith.constant 0 : index
    %0 = vector.load %arg2[%c0, %c0_0] : memref<8x16xf32, #tpu.memory_space<vmem>>, vector<8x16xf32>
    %c0_1 = arith.constant 0 : index
    %c0_2 = arith.constant 0 : index
    %1 = vector.load %arg3[%c0_1, %c0_2] : memref<16x128xf32, #tpu.memory_space<vmem>>, vector<16x128xf32>
    %cst = arith.constant dense<0.000000e+00> : vector<8x128xf32>
    %2 = tpu.matmul %0, %1, %cst {dimension_numbers = #tpu.dot_dimension_numbers<[1], [0], [0], [1], [0, 0, 1, 1], [], []>} : vector<8x16xf32>, vector<16x128xf32>, vector<8x128xf32> -> vector<8x128xf32>
    %c0_3 = arith.constant 0 : index
    %c0_4 = arith.constant 0 : index
    %3 = vector.load %arg4[%c0_3, %c0_4] : memref<1x128xf32, #tpu.memory_space<vmem>>, vector<1x128xf32>
    %4 = vector.broadcast %3 : vector<1x128xf32> to vector<8x128xf32>
    %5 = arith.addf %2, %4 : vector<8x128xf32>
    %6 = math.tanh %5 : vector<8x128xf32>
    %c0_5 = arith.constant 0 : index
    %c0_6 = arith.constant 0 : index
    %7 = vector.load %arg5[%c0_5, %c0_6] : memref<128x128xf32, #tpu.memory_space<vmem>>, vector<128x128xf32>
    %cst_7 = arith.constant dense<0.000000e+00> : vector<8x128xf32>
    %8 = tpu.matmul %6, %7, %cst_7 {dimension_numbers = #tpu.dot_dimension_numbers<[1], [0], [0], [1], [0, 0, 1, 1], [], []>} : vector<8x128xf32>, vector<128x128xf32>, vector<8x128xf32> -> vector<8x128xf32>
    %c0_8 = arith.constant 0 : index
    %c0_9 = arith.constant 0 : index
    %9 = vector.load %arg6[%c0_8, %c0_9] : memref<1x128xf32, #tpu.memory_space<vmem>>, vector<1x128xf32>
    %10 = vector.broadcast %9 : vector<1x128xf32> to vector<8x128xf32>
    %11 = arith.addf %8, %10 : vector<8x128xf32>
    %12 = arith.negf %11 : vector<8x128xf32>
    %13 = math.exp %12 : vector<8x128xf32>
    %cst_10 = arith.constant 1.000000e+00 : f32
    %14 = vector.broadcast %cst_10 : f32 to vector<8x128xf32>
    %15 = arith.addf %14, %13 : vector<8x128xf32>
    %16 = arith.divf %14, %15 : vector<8x128xf32>
    %c0_11 = arith.constant 0 : index
    %c0_12 = arith.constant 0 : index
    %17 = vector.load %arg7[%c0_11, %c0_12] : memref<8x128xf32, #tpu.memory_space<vmem>>, vector<8x128xf32>
    tpu.vector_store %arg7[%c0_11, %c0_12], %16 {strides = array<i32>} : memref<8x128xf32, #tpu.memory_space<vmem>>, vector<8x128xf32>,
    return
  }
  func.func @transform_0(%arg0: i32, %arg1: i32) -> (i32, i32) {
    %c0_i32 = arith.constant 0 : i32
    %c0_i32_0 = arith.constant 0 : i32
    return %arg0, %c0_i32 : i32, i32
  }
  func.func @transform_1(%arg0: i32, %arg1: i32) -> (i32, i32) {
    %c0_i32 = arith.constant 0 : i32
    %c0_i32_0 = arith.constant 0 : i32
    %c0_i32_1 = arith.constant 0 : i32
    return %c0_i32, %c0_i32_0 : i32, i32
  }
  func.func @transform_2(%arg0: i32, %arg1: i32) -> (i32, i32) {
    %c0_i32 = arith.constant 0 : i32
    %c0_i32_0 = arith.constant 0 : i32
    %c0_i32_1 = arith.constant 0 : i32
    return %c0_i32, %c0_i32_0 : i32, i32
  }
  func.func @transform_3(%arg0: i32, %arg1: i32) -> (i32, i32) {
    %c0_i32 = arith.constant 0 : i32
    %c0_i32_0 = arith.constant 0 : i32
    %c0_i32_1 = arith.constant 0 : i32
    return %c0_i32, %c0_i32_0 : i32, i32
  }
  func.func @transform_4(%arg0: i32, %arg1: i32) -> (i32, i32) {
    %c0_i32 = arith.constant 0 : i32
    %c0_i32_0 = arith.constant 0 : i32
    %c0_i32_1 = arith.constant 0 : i32
    return %c0_i32, %c0_i32_0 : i32, i32
  }
  func.func @transform_5(%arg0: i32, %arg1: i32) -> (i32, i32) {
    %c0_i32 = arith.constant 0 : i32
    return %arg0, %arg1 : i32, i32
  }
}

</mosaic_0001>

<llo_original>
// kernel: tpu_custom_call.1
$region0: #{tpu_custom_call.1}
  #allocation0 [shape = 'u32[]', space=smem, size = 0x4, offset = 0x4, fixed_abs, tag = 'smem constant byte address 0x4 - core index']
  #allocation1 [shape = 'u32[144,128]{1,0:T(1,128)}', space=vmem, size = 0x12000, scoped, tag = 'internal scratch']
  %s0 = inlined_call_operand.hbm [shape: f32[8,16], index: 0, kind: input, shape index: {}]
  %s1 = inlined_call_operand.hbm [shape: f32[16,128], index: 1, kind: input, shape index: {}]
  %s2 = inlined_call_operand.vmem [shape: f32[1,128], index: 2, kind: input, shape index: {}]
  %s3 = inlined_call_operand.hbm [shape: f32[128,128], index: 3, kind: input, shape index: {}]
  %s4 = inlined_call_operand.vmem [shape: f32[1,128], index: 4, kind: input, shape index: {}]
  %s5 = inlined_call_operand.hbm [shape: f32[8,128], index: 5, kind: output, shape index: {}]
  %s6 = sld [smem:[#allocation0]]
  $region42: #{tpu_custom_call.1} parent=0
    _
  %s8 = ssub.s32 1, %s6
  %s9 = scalar_select 0, %s8, %s6
  $region1: #{tpu_custom_call.1} parent=0
    #allocation2 [shape = 'u8[4096]{0}', space=vmem, size = 0x1000, scoped, tag = 'input window, operand 0, single buffered']
    #allocation3 [shape = 's32[1]{0}', space=sflag, size = 0x4, scoped, tag = 'scoped memory for tpu_custom_call.1']
    #allocation4 [shape = 's32[1]{0}', space=sflag, size = 0x4, scoped, tag = 'scoped memory for tpu_custom_call.1']
    #allocation5 [shape = 'u8[8192]{0}', space=vmem, size = 0x2000, scoped, tag = 'input window, operand 1, single buffered']
    #allocation6 [shape = 's32[1]{0}', space=sflag, size = 0x4, scoped, tag = 'scoped memory for tpu_custom_call.1']
    #allocation7 [shape = 'u8[65536]{0}', space=vmem, size = 0x10000, scoped, tag = 'input window, operand 3, single buffered']
    #allocation8 [shape = 'u8[4096]{0}', space=vmem, size = 0x1000, scoped, tag = 'output window, operand 0, single buffered']
    %10 = vsyncpa [#allocation3], 0
    %11 = vsyncpa [#allocation6], 0
    %12 = vsyncpa [#allocation4], 0
    // Predicated region
    $region2: #{tpu_custom_call.1} parent=1 // pred_check
      _
    $region3: #{tpu_custom_call.1} parent=1 // pred_check_branch
      %14 = sbr.rel (0) target = $region5
    $region4: #{tpu_custom_call.1} parent=1 // pred_region
      %s16 = ssub.s32 128, 128
      %17 = vsyncadd [#allocation3], %s16
      %s19 = sshll.u32 [#allocation2], 4
      %s20 = int_to_ptr.vmem [resolvable:$true] %s19
      %22 = dma.hbm_to_vmem [thread:$0]  %s0, 128, %s20, [#allocation3]
    $region5: #{tpu_custom_call.1} parent=1 // pred_fallthru
      _
    // Predicated region
    $region6: #{tpu_custom_call.1} parent=1 // pred_check
      _
    $region7: #{tpu_custom_call.1} parent=1 // pred_check_branch
      %24 = sbr.rel (0) target = $region9
    $region8: #{tpu_custom_call.1} parent=1 // pred_region
      %s26 = ssub.s32 256, 256
      %27 = vsyncadd [#allocation6], %s26
      %s28 = sshll.u32 [#allocation5], 4
      %s29 = int_to_ptr.vmem [resolvable:$true] %s28
      %34 = dma.hbm_to_vmem [thread:$0]  %s1, 256, %s29, [#allocation6], 128, 128, 8
    $region9: #{tpu_custom_call.1} parent=1 // pred_fallthru
      _
    // Predicated region
    $region10: #{tpu_custom_call.1} parent=1 // pred_check
      _
    $region11: #{tpu_custom_call.1} parent=1 // pred_check_branch
      %36 = sbr.rel (0) target = $region13
    $region12: #{tpu_custom_call.1} parent=1 // pred_region
      _
    $region13: #{tpu_custom_call.1} parent=1 // pred_fallthru
      _
    // Predicated region
    $region14: #{tpu_custom_call.1} parent=1 // pred_check
      _
    $region15: #{tpu_custom_call.1} parent=1 // pred_check_branch
      %38 = sbr.rel (0) target = $region17
    $region16: #{tpu_custom_call.1} parent=1 // pred_region
      %s40 = ssub.s32 2048, 2048
      %41 = vsyncadd [#allocation6], %s40
      %s42 = sshll.u32 [#allocation7], 4
      %s43 = int_to_ptr.vmem [resolvable:$true] %s42
      %48 = dma.hbm_to_vmem [thread:$0]  %s3, 2048, %s43, [#allocation6], 128, 128, 8
    $region17: #{tpu_custom_call.1} parent=1 // pred_fallthru
      _
    // Predicated region
    $region18: #{tpu_custom_call.1} parent=1 // pred_check
      _
    $region19: #{tpu_custom_call.1} parent=1 // pred_check_branch
      %50 = sbr.rel (0) target = $region21
    $region20: #{tpu_custom_call.1} parent=1 // pred_region
      _
    $region21: #{tpu_custom_call.1} parent=1 // pred_fallthru
      _
    // Predicated region
    $region22: #{tpu_custom_call.1} parent=1 // pred_check
      _
    $region23: #{tpu_custom_call.1} parent=1 // pred_check_branch
      %52 = sbr.rel (0) target = $region25
    $region24: #{tpu_custom_call.1} parent=1 // pred_region
      %53 = dma.done [#allocation3], 128
    $region25: #{tpu_custom_call.1} parent=1 // pred_fallthru
      _
    // Predicated region
    $region26: #{tpu_custom_call.1} parent=1 // pred_check
      _
    $region27: #{tpu_custom_call.1} parent=1 // pred_check_branch
      %55 = sbr.rel (0) target = $region29
    $region28: #{tpu_custom_call.1} parent=1 // pred_region
      %56 = dma.done [#allocation6], 256
    $region29: #{tpu_custom_call.1} parent=1 // pred_fallthru
      _
    // Predicated region
    $region30: #{tpu_custom_call.1} parent=1 // pred_check
      _
    $region31: #{tpu_custom_call.1} parent=1 // pred_check_branch
      %58 = sbr.rel (0) target = $region33
    $region32: #{tpu_custom_call.1} parent=1 // pred_region
      %59 = dma.done [#allocation6], 2048
    $region33: #{tpu_custom_call.1} parent=1 // pred_fallthru
      _
    %v60 = vld [vmem:[#allocation2] sm:$0xff]
    %v61 = vld [vmem:[#allocation5] sm:$0xff]
    %v62 = vld [vmem:[#allocation5 + $0x8] sm:$0xff]
    %v63 = vld [vmem:[%s2] sm:$0x1]
    %v65 = vlaneseq
    %v66 = vshrl.u32 %v65, 7
    %v67 = vsub.s32 0, %v66
    %v68 = vrot.slane %v63, %v67
    %vm70 = vcmask 130048
    %v72 = vsel %vm70, %v60, 0
    %74 = vmatprep.subr.mxu0 0.0
    %75 = vmatpush1.msra.mxu0 %v61
    %76 = vmatprep.subr.mxu0 0.0
    %77 = vmatpush1.msra.mxu0 %v62
    %78 = vmatprep.subr.mxu0 0.0
    %79 = vmatpush1.msra.mxu0 0.0
    %80 = vmatprep.subr.mxu0 0.0
    %81 = vmatpush1.msra.mxu0 0.0
    %82 = vmatprep.subr.mxu0 0.0
    %83 = vmatpush1.msra.mxu0 0.0
    %84 = vmatprep.subr.mxu0 0.0
    %85 = vmatpush1.msra.mxu0 0.0
    %86 = vmatprep.subr.mxu0 0.0
    %87 = vmatpush1.msra.mxu0 0.0
    %88 = vmatprep.subr.mxu0 0.0
    %89 = vmatpush1.msra.mxu0 0.0
    %90 = vmatprep.subr.mxu0 0.0
    %91 = vmatpush1.msra.mxu0 0.0
    %92 = vmatprep.subr.mxu0 0.0
    %93 = vmatpush1.msra.mxu0 0.0
    %94 = vmatprep.subr.mxu0 0.0
    %95 = vmatpush1.msra.mxu0 0.0
    %96 = vmatprep.subr.mxu0 0.0
    %97 = vmatpush1.msra.mxu0 0.0
    %98 = vmatprep.subr.mxu0 0.0
    %99 = vmatpush1.msra.mxu0 0.0
    %100 = vmatprep.subr.mxu0 0.0
    %101 = vmatpush1.msra.mxu0 0.0
    %102 = vmatprep.subr.mxu0 0.0
    %103 = vmatpush1.msra.mxu0 0.0
    %104 = vmatprep.subr.mxu0 0.0
    %105 = vmatpush1.msra.mxu0 0.0
    %106 = vmatprep.subr.mxu0 0.0
    %107 = vmatpush1.msra.mxu0 0.0
    %108 = vmatprep.subr.mxu0 0.0
    %109 = vmatpush1.msra.mxu0 0.0
    %110 = vmatprep.subr.mxu0 0.0
    %111 = vmatpush1.msra.mxu0 0.0
    %112 = vmatprep.subr.mxu0 0.0
    %113 = vmatpush1.msra.mxu0 0.0
    %114 = vmatprep.subr.mxu0 0.0
    %115 = vmatpush1.msra.mxu0 0.0
    %116 = vmatprep.subr.mxu0 0.0
    %117 = vmatpush1.msra.mxu0 0.0
    %118 = vmatprep.subr.mxu0 0.0
    %119 = vmatpush1.msra.mxu0 0.0
    %120 = vmatprep.subr.mxu0 0.0
    %121 = vmatpush1.msra.mxu0 0.0
    %122 = vmatprep.subr.mxu0 0.0
    %123 = vmatpush1.msra.mxu0 0.0
    %124 = vmatprep.subr.mxu0 0.0
    %125 = vmatpush1.msra.mxu0 0.0
    %126 = vmatprep.subr.mxu0 0.0
    %127 = vmatpush1.msra.mxu0 0.0
    %128 = vmatprep.subr.mxu0 0.0
    %129 = vmatpush1.msra.mxu0 0.0
    %130 = vmatprep.subr.mxu0 0.0
    %131 = vmatpush1.msra.mxu0 0.0
    %132 = vmatprep.subr.mxu0 0.0
    %133 = vmatpush1.msra.mxu0 0.0
    %134 = vmatprep.subr.mxu0 0.0
    %135 = vmatpush1.msra.mxu0 0.0
    %136 = vmatprep.subr.mxu0 0.0
    %137 = vmatpush1.msra.mxu0 0.0
    %138 = vmatprep.mubr.f32.mxu0 0.0
    %139 = vmatmul.mubr.f32.gmra.mrb[0].mxu0 %v72
    %v140 = vpop.f32.mrb[0].mxu0
    %v141 = vadd.f32 %v68, %v140
    %v142 = vpop.f32.mrb[0].mxu0
    %143 = vdwg.mxu0
    %v144 = vtanh.pop %v141
    %v145 = vld [vmem:[#allocation7] sm:$0xff]
    %v146 = vld [vmem:[#allocation7 + $0x8] sm:$0xff]
    %v147 = vld [vmem:[#allocation7 + $0x10] sm:$0xff]
    %v148 = vld [vmem:[#allocation7 + $0x18] sm:$0xff]
    %v149 = vld [vmem:[#allocation7 + $0x20] sm:$0xff]
    %v150 = vld [vmem:[#allocation7 + $0x28] sm:$0xff]
    %v151 = vld [vmem:[#allocation7 + $0x30] sm:$0xff]
    %v152 = vld [vmem:[#allocation7 + $0x38] sm:$0xff]
    %v153 = vld [vmem:[#allocation7 + $0x40] sm:$0xff]
    %v154 = vld [vmem:[#allocation7 + $0x48] sm:$0xff]
    %v155 = vld [vmem:[#allocation7 + $0x50] sm:$0xff]
    %v156 = vld [vmem:[#allocation7 + $0x58] sm:$0xff]
    %v157 = vld [vmem:[#allocation7 + $0x60] sm:$0xff]
    %v158 = vld [vmem:[#allocation7 + $0x68] sm:$0xff]
    %v159 = vld [vmem:[#allocation7 + $0x70] sm:$0xff]
    %v160 = vld [vmem:[#allocation7 + $0x78] sm:$0xff]
    %v161 = vld [vmem:[%s4] sm:$0x1]
    %v163 = vlaneseq
    %v164 = vshrl.u32 %v163, 7
    %v165 = vsub.s32 0, %v164
    %v166 = vrot.slane %v161, %v165
    %168 = vmatprep.subr.mxu0 0.0
    %169 = vmatpush1.msra.mxu0 %v145
    %170 = vmatprep.subr.mxu0 0.0
    %171 = vmatpush1.msra.mxu0 %v146
    %172 = vmatprep.subr.mxu0 0.0
    %173 = vmatpush1.msra.mxu0 %v147
    %174 = vmatprep.subr.mxu0 0.0
    %175 = vmatpush1.msra.mxu0 %v148
    %176 = vmatprep.subr.mxu0 0.0
    %177 = vmatpush1.msra.mxu0 %v149
    %178 = vmatprep.subr.mxu0 0.0
    %179 = vmatpush1.msra.mxu0 %v150
    %180 = vmatprep.subr.mxu0 0.0
    %181 = vmatpush1.msra.mxu0 %v151
    %182 = vmatprep.subr.mxu0 0.0
    %183 = vmatpush1.msra.mxu0 %v152
    %184 = vmatprep.subr.mxu0 0.0
    %185 = vmatpush1.msra.mxu0 %v153
    %186 = vmatprep.subr.mxu0 0.0
    %187 = vmatpush1.msra.mxu0 %v154
    %188 = vmatprep.subr.mxu0 0.0
    %189 = vmatpush1.msra.mxu0 %v155
    %190 = vmatprep.subr.mxu0 0.0
    %191 = vmatpush1.msra.mxu0 %v156
    %192 = vmatprep.subr.mxu0 0.0
    %193 = vmatpush1.msra.mxu0 %v157
    %194 = vmatprep.subr.mxu0 0.0
    %195 = vmatpush1.msra.mxu0 %v158
    %196 = vmatprep.subr.mxu0 0.0
    %197 = vmatpush1.msra.mxu0 %v159
    %198 = vmatprep.subr.mxu0 0.0
    %199 = vmatpush1.msra.mxu0 %v160
    %200 = vmatprep.subr.mxu0 0.0
    %201 = vmatpush1.msra.mxu0 0.0
    %202 = vmatprep.subr.mxu0 0.0
    %203 = vmatpush1.msra.mxu0 0.0
    %204 = vmatprep.subr.mxu0 0.0
    %205 = vmatpush1.msra.mxu0 0.0
    %206 = vmatprep.subr.mxu0 0.0
    %207 = vmatpush1.msra.mxu0 0.0
    %208 = vmatprep.subr.mxu0 0.0
    %209 = vmatpush1.msra.mxu0 0.0
    %210 = vmatprep.subr.mxu0 0.0
    %211 = vmatpush1.msra.mxu0 0.0
    %212 = vmatprep.subr.mxu0 0.0
    %213 = vmatpush1.msra.mxu0 0.0
    %214 = vmatprep.subr.mxu0 0.0
    %215 = vmatpush1.msra.mxu0 0.0
    %216 = vmatprep.subr.mxu0 0.0
    %217 = vmatpush1.msra.mxu0 0.0
    %218 = vmatprep.subr.mxu0 0.0
    %219 = vmatpush1.msra.mxu0 0.0
    %220 = vmatprep.subr.mxu0 0.0
    %221 = vmatpush1.msra.mxu0 0.0
    %222 = vmatprep.subr.mxu0 0.0
    %223 = vmatpush1.msra.mxu0 0.0
    %224 = vmatprep.subr.mxu0 0.0
    %225 = vmatpush1.msra.mxu0 0.0
    %226 = vmatprep.subr.mxu0 0.0
    %227 = vmatpush1.msra.mxu0 0.0
    %228 = vmatprep.subr.mxu0 0.0
    %229 = vmatpush1.msra.mxu0 0.0
    %230 = vmatprep.subr.mxu0 0.0
    %231 = vmatpush1.msra.mxu0 0.0
    %232 = vmatprep.mubr.f32.mxu0 0.0
    %233 = vmatmul.mubr.f32.gmra.mrb[0].mxu0 %v144
    %v234 = vpop.f32.mrb[0].mxu0
    %v235 = vadd.f32 %v166, %v234
    %v236 = vpop.f32.mrb[0].mxu0
    %237 = vdwg.mxu0
    %v238 = vxor.u32 %v235, 2147483648
    %v239 = vmul.f32 %v238, 1.442695
    %v240 = vpow.pop %v239
    %v241 = vadd.f32 %v240, 1.0
    %v242 = vrcp.pop %v241
    %v243 = vmul.f32 1.0, %v242
    %244 = vst [vmem:[#allocation8] sm:$0xff] %v243
    // Predicated region
    $region34: #{tpu_custom_call.1} parent=1 // pred_check
      _
    $region35: #{tpu_custom_call.1} parent=1 // pred_check_branch
      %246 = sbr.rel (0) target = $region37
    $region36: #{tpu_custom_call.1} parent=1 // pred_region
      %s248 = ssub.s32 128, 128
      %249 = vsyncadd [#allocation4], %s248
      %s251 = sshll.u32 [#allocation8], 4
      %s252 = int_to_ptr.vmem [resolvable:$true] %s251
      %254 = dma.vmem_to_hbm [thread:$0]  %s252, 128, %s5, [#allocation4]
    $region37: #{tpu_custom_call.1} parent=1 // pred_fallthru
      _
    // Predicated region
    $region38: #{tpu_custom_call.1} parent=1 // pred_check
      _
    $region39: #{tpu_custom_call.1} parent=1 // pred_check_branch
      %256 = sbr.rel (0) target = $region41
    $region40: #{tpu_custom_call.1} parent=1 // pred_region
      %257 = dma.done [#allocation4], 128
    $region41: #{tpu_custom_call.1} parent=1 // pred_fallthru
      _
    %258 = vsyncpa [#allocation3], 1
    %259 = vsyncpa [#allocation6], 1
    %260 = vsyncpa [#allocation4], 1

</llo_original>
